<compile_context>
chip_gen: v6e
topology: v6e:2x2x1
jax: 0.10.0
libtpu: 0.0.40
codegen_flags: <defaults>
</compile_context>

<pallas_src>
import jax
import jax.numpy as jnp
from jax.experimental import pallas as pl
from jax.experimental.pallas import tpu as pltpu

LANE = 128
NEG_INF = -1e30


def _round_up(n, m):
    return ((n + m - 1) // m) * m


def _cdiv(a, b):
    return -(-a // b)


# --------------------------------------------------------------------------- #
# Kernel
# --------------------------------------------------------------------------- #
def actor_kernel(x_ref, h_ref,
                 we_ref, be_ref,          # encoder:  W^T bf16 (in, HID_P), b f32 (1, HID_P)
                 wgx_ref, wgh_ref, bg_ref,  # GRU: bf16 (HID_P,4H_P), bf16 (H_P,4H_P), f32 (1,4H_P)
                 wo_ref, bo_ref,          # head:     W^T bf16 (H_P, OUT_P), b f32 (1, OUT_P)
                 probs_ref, hout_ref):
    bf = jnp.bfloat16
    x = x_ref[...]                        # (TILE_B, in_size) f32
    h = h_ref[...]                        # (TILE_B, H_P)     f32 (state kept in f32)

    # ---- encoder + SiLU (f32 accumulation, bf16 MXU operands) --------------
    enc = jnp.dot(x.astype(bf), we_ref[...],
                  preferred_element_type=jnp.float32) + be_ref[...]
    enc = enc * jax.nn.sigmoid(enc)       # padded columns stay exactly 0

    # ---- GRUCell: two MXU passes, no lane-dim concat -----------------------
    # Column blocks of wg_x / wg_h (each H_P wide, 128-aligned): [ r | z | gi_n | gh_n ].
    Hp = h.shape[-1]
    g = (jnp.dot(enc.astype(bf), wgx_ref[...], preferred_element_type=jnp.float32)
         + jnp.dot(h.astype(bf), wgh_ref[...], preferred_element_type=jnp.float32)
         + bg_ref[...])

    r = jax.nn.sigmoid(g[:, 0 * Hp:1 * Hp])    # 128-aligned slices: pure VPU/EUP
    z = jax.nn.sigmoid(g[:, 1 * Hp:2 * Hp])
    n = jnp.tanh(g[:, 2 * Hp:3 * Hp] + r * g[:, 3 * Hp:4 * Hp])
    h_out = (1.0 - z) * n + z * h              # padded columns stay exactly 0

    # ---- head + softmax over actions ----------------------------------------
    # Padded logit columns have bias -1e30 -> exp underflows to exactly 0.
    logits = jnp.dot(h_out.astype(bf), wo_ref[...],
                     preferred_element_type=jnp.float32) + bo_ref[...]
    m = jnp.max(logits, axis=1, keepdims=True)
    e = jnp.exp(logits - m)
    s = jnp.sum(e, axis=1, keepdims=True)
    inv = pl.reciprocal(s, approx=True)        # EUP estimate ...
    inv = inv * (2.0 - s * inv)                # ... + one Newton step (f32-accurate)

    probs_ref[...] = (e * inv).astype(probs_ref.dtype)
    hout_ref[...] = h_out.astype(hout_ref.dtype)


# --------------------------------------------------------------------------- #
# Parameter packing (padded, fused, bf16 weights / f32 biases)
# --------------------------------------------------------------------------- #
def prepare_params(p, input_size, hidden_size, rnn_hidden, output_size):
    """Pack raw (PyTorch-layout) params into the padded/fused kernel layout."""
    HID_P = _round_up(hidden_size, LANE)
    H_P = _round_up(rnn_hidden, LANE)
    OUT_P = _round_up(output_size, LANE)
    H = rnn_hidden
    bf = jnp.bfloat16

    we = jnp.zeros((input_size, HID_P), jnp.float32).at[:, :hidden_size].set(p["we_t"])
    be = jnp.zeros((1, HID_P), jnp.float32).at[0, :hidden_size].set(p["be"])

    wih, whh, bih, bhh = p["wih_t"], p["whh_t"], p["bih"], p["bhh"]
    wgx = jnp.zeros((HID_P, 4 * H_P), jnp.float32)   # input (enc) path
    wgh = jnp.zeros((H_P, 4 * H_P), jnp.float32)     # hidden path
    bg = jnp.zeros((1, 4 * H_P), jnp.float32)
    # r and z gates: input + hidden contributions land in the same columns, biases pre-summed.
    for k in range(2):
        wgx = wgx.at[:hidden_size, k * H_P:k * H_P + H].set(wih[:, k * H:(k + 1) * H])
        wgh = wgh.at[:H, k * H_P:k * H_P + H].set(whh[:, k * H:(k + 1) * H])
        bg = bg.at[0, k * H_P:k * H_P + H].set(bih[k * H:(k + 1) * H] + bhh[k * H:(k + 1) * H])
    # n gate: gi_n (input path, block 2) and gh_n (hidden path, block 3) kept separate so the
    # kernel can compute n = tanh(gi_n + r * gh_n) exactly (PyTorch GRUCell semantics).
    wgx = wgx.at[:hidden_size, 2 * H_P:2 * H_P + H].set(wih[:, 2 * H:3 * H])
    bg = bg.at[0, 2 * H_P:2 * H_P + H].set(bih[2 * H:3 * H])
    wgh = wgh.at[:H, 3 * H_P:3 * H_P + H].set(whh[:, 2 * H:3 * H])
    bg = bg.at[0, 3 * H_P:3 * H_P + H].set(bhh[2 * H:3 * H])

    wo = jnp.zeros((H_P, OUT_P), jnp.float32).at[:H, :output_size].set(p["wo_t"])
    bo = jnp.full((1, OUT_P), NEG_INF, jnp.float32).at[0, :output_size].set(p["bo"])

    return {"we": we.astype(bf), "be": be,
            "wgx": wgx.astype(bf), "wgh": wgh.astype(bf), "bg": bg,
            "wo": wo.astype(bf), "bo": bo}


# --------------------------------------------------------------------------- #
# Wrapper
# --------------------------------------------------------------------------- #
def _batch_tiling(B, cap=512):
    """Smallest number of >=8-row tiles under `cap`; >=2 tiles when B>=16 (v7x 2 TCs)."""
    n_tiles = max(1, _cdiv(B, cap))
    if B >= 16:
        n_tiles = max(n_tiles, 2)
    tile = _round_up(_cdiv(B, n_tiles), 8)
    return tile, tile * n_tiles


def _vmem_limit_bytes(tile_b, in_size, hid_p, h_p, out_p, kp):
    weights = sum(int(v.size) * v.dtype.itemsize for v in kp.values())
    acts_in = tile_b * (in_size + h_p) * 4
    acts_out = tile_b * (out_p + h_p) * 4
    live = tile_b * (hid_p + 4 * h_p + 4 * h_p + 2 * out_p) * 4   # enc, g, gates, logits/e
    est = 2 * weights + 2 * (acts_in + acts_out) + live           # default double-buffering
    return int(min(64 << 20, max(8 << 20, 2 * est)))


@jax.jit
def actor_forward(x, h_pad, kp):
    """x: (B, input_size) f32, h_pad: (B_pad, H_P) f32 (persistent padded state).

    Returns padded (probs_pad (B_pad, OUT_P), h_out_pad (B_pad, H_P)); slice if needed."""
    B, in_size = x.shape
    HID_P = kp["we"].shape[1]
    H_P, OUT_P = kp["wo"].shape[0], kp["wo"].shape[1]

    TILE_B, B_pad = _batch_tiling(B)
    assert h_pad.shape == (B_pad, H_P), (h_pad.shape, (B_pad, H_P))
    if B_pad != B:
        x = jnp.pad(x, ((0, B_pad - B), (0, 0)))

    def row_spec(shape):
        return pl.BlockSpec(shape, lambda i: (i, 0))

    def resident_spec(arr):
        return pl.BlockSpec(arr.shape, lambda i: (0, 0))

    probs_pad, h_out_pad = pl.pallas_call(
        actor_kernel,
        out_shape=(jax.ShapeDtypeStruct((B_pad, OUT_P), jnp.float32),
                   jax.ShapeDtypeStruct((B_pad, H_P), jnp.float32)),
        grid=(B_pad // TILE_B,),
        in_specs=[row_spec((TILE_B, in_size)),      # x: true feature width (== full dim)
                  row_spec((TILE_B, H_P)),
                  resident_spec(kp["we"]), resident_spec(kp["be"]),
                  resident_spec(kp["wgx"]), resident_spec(kp["wgh"]), resident_spec(kp["bg"]),
                  resident_spec(kp["wo"]), resident_spec(kp["bo"])],
        out_specs=(row_spec((TILE_B, OUT_P)),
                   row_spec((TILE_B, H_P))),
        input_output_aliases={1: 1},                 # update hidden state in place
        compiler_params=pltpu.CompilerParams(
            dimension_semantics=("parallel",),
            vmem_limit_bytes=_vmem_limit_bytes(TILE_B, in_size, HID_P, H_P, OUT_P, kp)),
    )(x, h_pad, kp["we"], kp["be"], kp["wgx"], kp["wgh"], kp["bg"], kp["wo"], kp["bo"])

    return probs_pad, h_out_pad


# --------------------------------------------------------------------------- #
# Init + references (mirror the PyTorch forward)
# --------------------------------------------------------------------------- #
def init_params(key, input_size, hidden_size, rnn_hidden_size, output_size):
    ks = jax.random.split(key, 6)

    def xavier(k, fan_in, fan_out):
        std = jnp.sqrt(2.0 / (fan_in + fan_out))
        return std * jax.random.normal(k, (fan_in, fan_out), jnp.float32)

    def uni(k, shape, bound):
        return jax.random.uniform(k, shape, jnp.float32, -bound, bound)

    gb = 1.0 / jnp.sqrt(jnp.float32(rnn_hidden_size))
    return {
        "we_t": xavier(ks[0], input_size, hidden_size),
        "be": jnp.zeros((hidden_size,), jnp.float32),
        "wih_t": uni(ks[1], (hidden_size, 3 * rnn_hidden_size), gb),
        "bih": uni(ks[2], (3 * rnn_hidden_size,), gb),
        "whh_t": uni(ks[3], (rnn_hidden_size, 3 * rnn_hidden_size), gb),
        "bhh": uni(ks[4], (3 * rnn_hidden_size,), gb),
        "wo_t": xavier(ks[5], rnn_hidden_size, output_size),
        "bo": jnp.zeros((output_size,), jnp.float32),
    }


def _gru_tail(h_in, gi, gh, p, H):
    r = jax.nn.sigmoid(gi[:, :H] + gh[:, :H])
    z = jax.nn.sigmoid(gi[:, H:2 * H] + gh[:, H:2 * H])
    n = jnp.tanh(gi[:, 2 * H:] + r * gh[:, 2 * H:])
    return (1 - z) * n + z * h_in


def actor_reference_f32(x, h_in, p):
    enc = x @ p["we_t"] + p["be"]
    enc = enc * jax.nn.sigmoid(enc)
    H = h_in.shape[1]
    h_out = _gru_tail(h_in, enc @ p["wih_t"] + p["bih"], h_in @ p["whh_t"] + p["bhh"], p, H)
    return jax.nn.softmax(h_out @ p["wo_t"] + p["bo"], axis=1), h_out


def actor_reference_mixed(x, h_in, p):
    """Same precision recipe as the kernel: bf16 matmul operands, f32 everything else."""
    bf = jnp.bfloat16

    def mm(a, w):
        return jnp.dot(a.astype(bf), w.astype(bf), preferred_element_type=jnp.float32)

    enc = mm(x, p["we_t"]) + p["be"]
    enc = enc * jax.nn.sigmoid(enc)
    H = h_in.shape[1]
    h_out = _gru_tail(h_in, mm(enc, p["wih_t"]) + p["bih"], mm(h_in, p["whh_t"]) + p["bhh"], p, H)
    return jax.nn.softmax(mm(h_out, p["wo_t"]) + p["bo"], axis=1), h_out


# --------------------------------------------------------------------------- #
if __name__ == "__main__":
    B, INPUT, HIDDEN, RNN_H, OUT = 8, 16, 32, 32, 8

    key = jax.random.PRNGKey(0)
    k_x, k_h, k_p = jax.random.split(key, 3)

    x = jax.random.normal(k_x, (B, INPUT), jnp.float32)
    h_in = jax.random.normal(k_h, (B, RNN_H), jnp.float32)
    params = init_params(k_p, INPUT, HIDDEN, RNN_H, OUT)
    kparams = prepare_params(params, INPUT, HIDDEN, RNN_H, OUT)

    # Hidden state lives persistently in the padded (B_pad, H_P) layout (one-time pad).
    TILE_B, B_pad = _batch_tiling(B)
    H_P = kparams["wo"].shape[0]
    h_pad = jnp.zeros((B_pad, H_P), jnp.float32).at[:B, :RNN_H].set(h_in)

    probs_pad, h_out_pad = actor_forward(x, h_pad, kparams)
    jax.block_until_ready((probs_pad, h_out_pad))

    probs = probs_pad[:B, :OUT]
    h_out = h_out_pad[:B, :RNN_H]

    mixed_probs, mixed_h = actor_reference_mixed(x, h_in, params)
    f32_probs, f32_h = actor_reference_f32(x, h_in, params)

    assert probs.shape == (B, OUT) and h_out.shape == (B, RNN_H)
    assert bool(jnp.all(jnp.isfinite(probs_pad))) and bool(jnp.all(jnp.isfinite(h_out_pad)))
    # padded hidden columns stay exactly zero -> the padded state can be chained across steps
    assert jnp.allclose(h_out_pad[:, RNN_H:], 0.0)
    assert jnp.allclose(jnp.sum(probs, axis=1), 1.0, atol=1e-5)
    # tight check against a reference with the same mixed precision as the kernel
    assert jnp.allclose(probs, mixed_probs, atol=3e-3, rtol=3e-3)
    assert jnp.allclose(h_out, mixed_h, atol=3e-3, rtol=3e-3)
    # sanity check against the pure-f32 reference (bf16 matmuls -> looser tolerance)
    assert jnp.allclose(probs, f32_probs, atol=3e-2, rtol=3e-2)
    assert jnp.allclose(h_out, f32_h, atol=3e-2, rtol=3e-2)

    # Second step reusing the in-place-updated padded hidden state (state-carrying usage).
    probs_pad2, h_out_pad2 = actor_forward(x, h_out_pad, kparams)
    jax.block_until_ready((probs_pad2, h_out_pad2))
    assert jnp.allclose(jnp.sum(probs_pad2[:B, :OUT], axis=1), 1.0, atol=1e-5)

    print("KERNEL_OK")
</pallas_src>

<mosaic_0001>
module attributes {stable_mosaic.version = 11 : i64} {
  func.func @actor_kernel(%arg0: i32, %arg1: memref<8x16xf32, #tpu.memory_space<vmem>>, %arg2: memref<8x128xf32, #tpu.memory_space<vmem>>, %arg3: memref<16x128xbf16, #tpu.memory_space<vmem>>, %arg4: memref<1x128xf32, #tpu.memory_space<vmem>>, %arg5: memref<128x512xbf16, #tpu.memory_space<vmem>>, %arg6: memref<128x512xbf16, #tpu.memory_space<vmem>>, %arg7: memref<1x512xf32, #tpu.memory_space<vmem>>, %arg8: memref<128x128xbf16, #tpu.memory_space<vmem>>, %arg9: memref<1x128xf32, #tpu.memory_space<vmem>>, %arg10: memref<8x128xf32, #tpu.memory_space<vmem>>, %arg11: memref<8x128xf32, #tpu.memory_space<vmem>>) attributes {dimension_semantics = [#tpu.dimension_semantics<parallel>], iteration_bounds = array<i64: 1>, scalar_prefetch = 0 : i64, scratch_operands = 0 : i64, tpu.core_type = #tpu.core_type<tc>, window_params = [{transform_indices = @transform_0, window_bounds = array<i64: 8, 16>}, {transform_indices = @transform_1, window_bounds = array<i64: 8, 128>}, {pipeline_mode = #tpu.pipeline_mode<synchronous>, transform_indices = @transform_2, window_bounds = array<i64: 16, 128>}, {pipeline_mode = #tpu.pipeline_mode<synchronous>, transform_indices = @transform_3, window_bounds = array<i64: 1, 128>}, {pipeline_mode = #tpu.pipeline_mode<synchronous>, transform_indices = @transform_4, window_bounds = array<i64: 128, 512>}, {pipeline_mode = #tpu.pipeline_mode<synchronous>, transform_indices = @transform_5, window_bounds = array<i64: 128, 512>}, {pipeline_mode = #tpu.pipeline_mode<synchronous>, transform_indices = @transform_6, window_bounds = array<i64: 1, 512>}, {pipeline_mode = #tpu.pipeline_mode<synchronous>, transform_indices = @transform_7, window_bounds = array<i64: 128, 128>}, {pipeline_mode = #tpu.pipeline_mode<synchronous>, transform_indices = @transform_8, window_bounds = array<i64: 1, 128>}, {transform_indices = @transform_9, window_bounds = array<i64: 8, 128>}, {transform_indices = @transform_10, window_bounds = array<i64: 8, 128>}]} {
    %c0 = arith.constant 0 : index
    %c0_0 = arith.constant 0 : index
    %0 = vector.load %arg1[%c0, %c0_0] : memref<8x16xf32, #tpu.memory_space<vmem>>, vector<8x16xf32>
    %c0_1 = arith.constant 0 : index
    %c0_2 = arith.constant 0 : index
    %1 = vector.load %arg2[%c0_1, %c0_2] : memref<8x128xf32, #tpu.memory_space<vmem>>, vector<8x128xf32>
    %2 = arith.truncf %0 : vector<8x16xf32> to vector<8x16xbf16>
    %c0_3 = arith.constant 0 : index
    %c0_4 = arith.constant 0 : index
    %3 = vector.load %arg3[%c0_3, %c0_4] : memref<16x128xbf16, #tpu.memory_space<vmem>>, vector<16x128xbf16>
    %cst = arith.constant dense<0.000000e+00> : vector<8x128xf32>
    %4 = tpu.matmul %2, %3, %cst {dimension_numbers = #tpu.dot_dimension_numbers<[1], [0], [0], [1], [0, 0, 1, 1], [], []>} : vector<8x16xbf16>, vector<16x128xbf16>, vector<8x128xf32> -> vector<8x128xf32>
    %c0_5 = arith.constant 0 : index
    %c0_6 = arith.constant 0 : index
    %5 = vector.load %arg4[%c0_5, %c0_6] : memref<1x128xf32, #tpu.memory_space<vmem>>, vector<1x128xf32>
    %6 = vector.broadcast %5 : vector<1x128xf32> to vector<8x128xf32>
    %7 = arith.addf %4, %6 : vector<8x128xf32>
    %8 = arith.negf %7 : vector<8x128xf32>
    %9 = math.exp %8 : vector<8x128xf32>
    %cst_7 = arith.constant 1.000000e+00 : f32
    %10 = vector.broadcast %cst_7 : f32 to vector<8x128xf32>
    %11 = arith.addf %10, %9 : vector<8x128xf32>
    %12 = arith.divf %10, %11 : vector<8x128xf32>
    %13 = arith.mulf %7, %12 : vector<8x128xf32>
    %14 = arith.truncf %13 : vector<8x128xf32> to vector<8x128xbf16>
    %c0_8 = arith.constant 0 : index
    %c0_9 = arith.constant 0 : index
    %15 = vector.load %arg5[%c0_8, %c0_9] : memref<128x512xbf16, #tpu.memory_space<vmem>>, vector<128x512xbf16>
    %cst_10 = arith.constant dense<0.000000e+00> : vector<8x512xf32>
    %16 = tpu.matmul %14, %15, %cst_10 {dimension_numbers = #tpu.dot_dimension_numbers<[1], [0], [0], [1], [0, 0, 1, 1], [], []>} : vector<8x128xbf16>, vector<128x512xbf16>, vector<8x512xf32> -> vector<8x512xf32>
    %17 = arith.truncf %1 : vector<8x128xf32> to vector<8x128xbf16>
    %c0_11 = arith.constant 0 : index
    %c0_12 = arith.constant 0 : index
    %18 = vector.load %arg6[%c0_11, %c0_12] : memref<128x512xbf16, #tpu.memory_space<vmem>>, vector<128x512xbf16>
    %cst_13 = arith.constant dense<0.000000e+00> : vector<8x512xf32>
    %19 = tpu.matmul %17, %18, %cst_13 {dimension_numbers = #tpu.dot_dimension_numbers<[1], [0], [0], [1], [0, 0, 1, 1], [], []>} : vector<8x128xbf16>, vector<128x512xbf16>, vector<8x512xf32> -> vector<8x512xf32>
    %20 = arith.addf %16, %19 : vector<8x512xf32>
    %c0_14 = arith.constant 0 : index
    %c0_15 = arith.constant 0 : index
    %21 = vector.load %arg7[%c0_14, %c0_15] : memref<1x512xf32, #tpu.memory_space<vmem>>, vector<1x512xf32>
    %22 = vector.broadcast %21 : vector<1x512xf32> to vector<8x512xf32>
    %23 = arith.addf %20, %22 : vector<8x512xf32>
    %24 = vector.extract_strided_slice %23 {offsets = [0, 0], sizes = [8, 128], strides = [1, 1]} : vector<8x512xf32> to vector<8x128xf32>
    %25 = arith.negf %24 : vector<8x128xf32>
    %26 = math.exp %25 : vector<8x128xf32>
    %cst_16 = arith.constant 1.000000e+00 : f32
    %27 = vector.broadcast %cst_16 : f32 to vector<8x128xf32>
    %28 = arith.addf %27, %26 : vector<8x128xf32>
    %29 = arith.divf %27, %28 : vector<8x128xf32>
    %30 = vector.extract_strided_slice %23 {offsets = [0, 128], sizes = [8, 128], strides = [1, 1]} : vector<8x512xf32> to vector<8x128xf32>
    %31 = arith.negf %30 : vector<8x128xf32>
    %32 = math.exp %31 : vector<8x128xf32>
    %cst_17 = arith.constant 1.000000e+00 : f32
    %33 = vector.broadcast %cst_17 : f32 to vector<8x128xf32>
    %34 = arith.addf %33, %32 : vector<8x128xf32>
    %35 = arith.divf %33, %34 : vector<8x128xf32>
    %36 = vector.extract_strided_slice %23 {offsets = [0, 256], sizes = [8, 128], strides = [1, 1]} : vector<8x512xf32> to vector<8x128xf32>
    %37 = vector.extract_strided_slice %23 {offsets = [0, 384], sizes = [8, 128], strides = [1, 1]} : vector<8x512xf32> to vector<8x128xf32>
    %38 = arith.mulf %29, %37 : vector<8x128xf32>
    %39 = arith.addf %36, %38 : vector<8x128xf32>
    %40 = math.tanh %39 : vector<8x128xf32>
    %cst_18 = arith.constant 1.000000e+00 : f32
    %41 = vector.broadcast %cst_18 : f32 to vector<8x128xf32>
    %42 = arith.subf %41, %35 : vector<8x128xf32>
    %43 = arith.mulf %42, %40 : vector<8x128xf32>
    %44 = arith.mulf %35, %1 : vector<8x128xf32>
    %45 = arith.addf %43, %44 : vector<8x128xf32>
    %46 = arith.truncf %45 : vector<8x128xf32> to vector<8x128xbf16>
    %c0_19 = arith.constant 0 : index
    %c0_20 = arith.constant 0 : index
    %47 = vector.load %arg8[%c0_19, %c0_20] : memref<128x128xbf16, #tpu.memory_space<vmem>>, vector<128x128xbf16>
    %cst_21 = arith.constant dense<0.000000e+00> : vector<8x128xf32>
    %48 = tpu.matmul %46, %47, %cst_21 {dimension_numbers = #tpu.dot_dimension_numbers<[1], [0], [0], [1], [0, 0, 1, 1], [], []>} : vector<8x128xbf16>, vector<128x128xbf16>, vector<8x128xf32> -> vector<8x128xf32>
    %c0_22 = arith.constant 0 : index
    %c0_23 = arith.constant 0 : index
    %49 = vector.load %arg9[%c0_22, %c0_23] : memref<1x128xf32, #tpu.memory_space<vmem>>, vector<1x128xf32>
    %50 = vector.broadcast %49 : vector<1x128xf32> to vector<8x128xf32>
    %51 = arith.addf %48, %50 : vector<8x128xf32>
    %cst_24 = arith.constant dense<0xFF800000> : vector<8xf32>
    %52 = vector.multi_reduction <maximumf>, %51, %cst_24 [1] : vector<8x128xf32> to vector<8xf32>
    %53 = vector.shape_cast %52 : vector<8xf32> to vector<8x1xf32>
    %54 = vector.broadcast %53 : vector<8x1xf32> to vector<8x128xf32>
    %55 = arith.subf %51, %54 : vector<8x128xf32>
    %56 = math.exp %55 : vector<8x128xf32>
    %cst_25 = arith.constant dense<0.000000e+00> : vector<8xf32>
    %57 = vector.multi_reduction <add>, %56, %cst_25 [1] : vector<8x128xf32> to vector<8xf32>
    %58 = vector.shape_cast %57 : vector<8xf32> to vector<8x1xf32>
    %59 = tpu.reciprocal %58 {approx = true} : vector<8x1xf32> -> vector<8x1xf32>
    %60 = arith.mulf %58, %59 : vector<8x1xf32>
    %cst_26 = arith.constant 2.000000e+00 : f32
    %61 = vector.broadcast %cst_26 : f32 to vector<8x1xf32>
    %62 = arith.subf %61, %60 : vector<8x1xf32>
    %63 = arith.mulf %59, %62 : vector<8x1xf32>
    %64 = vector.broadcast %63 : vector<8x1xf32> to vector<8x128xf32>
    %65 = arith.mulf %56, %64 : vector<8x128xf32>
    %c0_27 = arith.constant 0 : index
    %c0_28 = arith.constant 0 : index
    %66 = vector.load %arg10[%c0_27, %c0_28] : memref<8x128xf32, #tpu.memory_space<vmem>>, vector<8x128xf32>
    tpu.vector_store %arg10[%c0_27, %c0_28], %65 {strides = array<i32>} : memref<8x128xf32, #tpu.memory_space<vmem>>, vector<8x128xf32>,
    %c0_29 = arith.constant 0 : index
    %c0_30 = arith.constant 0 : index
    %67 = vector.load %arg11[%c0_29, %c0_30] : memref<8x128xf32, #tpu.memory_space<vmem>>, vector<8x128xf32>
    tpu.vector_store %arg11[%c0_29, %c0_30], %45 {strides = array<i32>} : memref<8x128xf32, #tpu.memory_space<vmem>>, vector<8x128xf32>,
    return
  }
  func.func @transform_0(%arg0: i32) -> (i32, i32) {
    %c0_i32 = arith.constant 0 : i32
    %c0_i32_0 = arith.constant 0 : i32
    return %arg0, %c0_i32 : i32, i32
  }
  func.func @transform_1(%arg0: i32) -> (i32, i32) {
    %c0_i32 = arith.constant 0 : i32
    %c0_i32_0 = arith.constant 0 : i32
    return %arg0, %c0_i32 : i32, i32
  }
  func.func @transform_2(%arg0: i32) -> (i32, i32) {
    %c0_i32 = arith.constant 0 : i32
    %c0_i32_0 = arith.constant 0 : i32
    %c0_i32_1 = arith.constant 0 : i32
    return %c0_i32, %c0_i32_0 : i32, i32
  }
  func.func @transform_3(%arg0: i32) -> (i32, i32) {
    %c0_i32 = arith.constant 0 : i32
    %c0_i32_0 = arith.constant 0 : i32
    %c0_i32_1 = arith.constant 0 : i32
    return %c0_i32, %c0_i32_0 : i32, i32
  }
  func.func @transform_4(%arg0: i32) -> (i32, i32) {
    %c0_i32 = arith.constant 0 : i32
    %c0_i32_0 = arith.constant 0 : i32
    %c0_i32_1 = arith.constant 0 : i32
    return %c0_i32, %c0_i32_0 : i32, i32
  }
  func.func @transform_5(%arg0: i32) -> (i32, i32) {
    %c0_i32 = arith.constant 0 : i32
    %c0_i32_0 = arith.constant 0 : i32
    %c0_i32_1 = arith.constant 0 : i32
    return %c0_i32, %c0_i32_0 : i32, i32
  }
  func.func @transform_6(%arg0: i32) -> (i32, i32) {
    %c0_i32 = arith.constant 0 : i32
    %c0_i32_0 = arith.constant 0 : i32
    %c0_i32_1 = arith.constant 0 : i32
    return %c0_i32, %c0_i32_0 : i32, i32
  }
  func.func @transform_7(%arg0: i32) -> (i32, i32) {
    %c0_i32 = arith.constant 0 : i32
    %c0_i32_0 = arith.constant 0 : i32
    %c0_i32_1 = arith.constant 0 : i32
    return %c0_i32, %c0_i32_0 : i32, i32
  }
  func.func @transform_8(%arg0: i32) -> (i32, i32) {
    %c0_i32 = arith.constant 0 : i32
    %c0_i32_0 = arith.constant 0 : i32
    %c0_i32_1 = arith.constant 0 : i32
    return %c0_i32, %c0_i32_0 : i32, i32
  }
  func.func @transform_9(%arg0: i32) -> (i32, i32) {
    %c0_i32 = arith.constant 0 : i32
    %c0_i32_0 = arith.constant 0 : i32
    return %arg0, %c0_i32 : i32, i32
  }
  func.func @transform_10(%arg0: i32) -> (i32, i32) {
    %c0_i32 = arith.constant 0 : i32
    %c0_i32_0 = arith.constant 0 : i32
    return %arg0, %c0_i32 : i32, i32
  }
}

</mosaic_0001>

<llo_original>
// kernel: actor_forward.1
$region0: #{actor_forward.1}
  #allocation0 [shape = 'u32[]', space=smem, size = 0x4, offset = 0x4, fixed_abs, tag = 'smem constant byte address 0x4 - core index']
  #allocation1 [shape = 'u32[144,128]{1,0:T(1,128)}', space=vmem, size = 0x12000, scoped, tag = 'internal scratch']
  %s0 = inlined_call_operand.vmem [shape: f32[8,16], index: 0, kind: input, shape index: {}]
  %s1 = inlined_call_operand.hbm [shape: f32[8,128], index: 1, kind: input, shape index: {}, may-alias: {1,10}]
  %s2 = inlined_call_operand.vmem [shape: bf16[16,128], index: 2, kind: input, shape index: {}]
  %s3 = inlined_call_operand.hbm [shape: f32[1,128], index: 3, kind: input, shape index: {}]
  %s4 = inlined_call_operand.hbm [shape: bf16[128,512], index: 4, kind: input, shape index: {}]
  %s5 = inlined_call_operand.hbm [shape: bf16[128,512], index: 5, kind: input, shape index: {}]
  %s6 = inlined_call_operand.vmem [shape: f32[1,512], index: 6, kind: input, shape index: {}]
  %s7 = inlined_call_operand.hbm [shape: bf16[128,128], index: 7, kind: input, shape index: {}]
  %s8 = inlined_call_operand.hbm [shape: f32[1,128], index: 8, kind: input, shape index: {}]
  %s9 = inlined_call_operand.hbm [shape: f32[8,128], index: 9, kind: output, shape index: {0}]
  %s10 = inlined_call_operand.hbm [shape: f32[8,128], index: 10, kind: output, shape index: {1}, may-alias: {1,10}]
  %11 = xla_tuple %s9, %s10
  %s12 = sld [smem:[#allocation0]]
  $region78: #{actor_forward.1} parent=0
    _
  %s14 = ssub.s32 1, %s12
  %s15 = scalar_select 0, %s14, %s12
  $region1: #{actor_forward.1} parent=0
    #allocation2 [shape = 'u8[4096]{0}', space=vmem, size = 0x1000, scoped, tag = 'input window, operand 1, single buffered']
    #allocation3 [shape = 's32[1]{0}', space=sflag, size = 0x4, scoped, tag = 'scoped memory for actor_forward.1']
    #allocation4 [shape = 's32[1]{0}', space=sflag, size = 0x4, scoped, tag = 'scoped memory for actor_forward.1']
    #allocation5 [shape = 'u8[512]{0}', space=vmem, size = 0x400, scoped, tag = 'input window, operand 3, single buffered']
    #allocation6 [shape = 's32[1]{0}', space=sflag, size = 0x4, scoped, tag = 'scoped memory for actor_forward.1']
    #allocation7 [shape = 'u8[131072]{0}', space=vmem, size = 0x20000, scoped, tag = 'input window, operand 4, single buffered']
    #allocation8 [shape = 'u8[131072]{0}', space=vmem, size = 0x20000, scoped, tag = 'input window, operand 5, single buffered']
    #allocation9 [shape = 's32[1]{0}', space=sflag, size = 0x4, scoped, tag = 'scoped memory for actor_forward.1']
    #allocation10 [shape = 'u8[32768]{0}', space=vmem, size = 0x8000, scoped, tag = 'input window, operand 7, single buffered']
    #allocation11 [shape = 'u8[512]{0}', space=vmem, size = 0x400, scoped, tag = 'input window, operand 8, single buffered']
    #allocation12 [shape = 's32[1]{0}', space=sflag, size = 0x4, scoped, tag = 'scoped memory for actor_forward.1']
    #allocation13 [shape = 'u8[4096]{0}', space=vmem, size = 0x1000, scoped, tag = 'output window, operand 0, single buffered']
    #allocation14 [shape = 'u8[4096]{0}', space=vmem, size = 0x1000, scoped, tag = 'output window, operand 1, single buffered']
    #allocation15 [shape = 's32[1]{0}', space=sflag, size = 0x4, scoped, tag = 'scoped memory for actor_forward.1']
    %16 = vsyncpa [#allocation3], 0
    %17 = vsyncpa [#allocation6], 0
    %18 = vsyncpa [#allocation9], 0
    %19 = vsyncpa [#allocation12], 0
    %20 = vsyncpa [#allocation4], 0
    %21 = vsyncpa [#allocation15], 0
    // Predicated region
    $region2: #{actor_forward.1} parent=1 // pred_check
      _
    $region3: #{actor_forward.1} parent=1 // pred_check_branch
      %23 = sbr.rel (0) target = $region5
    $region4: #{actor_forward.1} parent=1 // pred_region
      _
    $region5: #{actor_forward.1} parent=1 // pred_fallthru
      _
    // Predicated region
    $region6: #{actor_forward.1} parent=1 // pred_check
      _
    $region7: #{actor_forward.1} parent=1 // pred_check_branch
      %25 = sbr.rel (0) target = $region9
    $region8: #{actor_forward.1} parent=1 // pred_region
      %s27 = ssub.s32 128, 128
      %28 = vsyncadd [#allocation3], %s27
      %s30 = sshll.u32 [#allocation2], 4
      %s31 = int_to_ptr.vmem [resolvable:$true] %s30
      %33 = dma.hbm_to_vmem [thread:$0]  %s1, 128, %s31, [#allocation3]
    $region9: #{actor_forward.1} parent=1 // pred_fallthru
      _
    // Predicated region
    $region10: #{actor_forward.1} parent=1 // pred_check
      _
    $region11: #{actor_forward.1} parent=1 // pred_check_branch
      %35 = sbr.rel (0) target = $region13
    $region12: #{actor_forward.1} parent=1 // pred_region
      _
    $region13: #{actor_forward.1} parent=1 // pred_fallthru
      _
    // Predicated region
    $region14: #{actor_forward.1} parent=1 // pred_check
      _
    $region15: #{actor_forward.1} parent=1 // pred_check_branch
      %37 = sbr.rel (0) target = $region17
    $region16: #{actor_forward.1} parent=1 // pred_region
      %s39 = ssub.s32 16, 16
      %40 = vsyncadd [#allocation6], %s39
      %s42 = sshll.u32 [#allocation5], 4
      %s43 = int_to_ptr.vmem [resolvable:$true] %s42
      %45 = dma.hbm_to_vmem [thread:$0]  %s3, 16, %s43, [#allocation6]
    $region17: #{actor_forward.1} parent=1 // pred_fallthru
      _
    // Predicated region
    $region18: #{actor_forward.1} parent=1 // pred_check
      _
    $region19: #{actor_forward.1} parent=1 // pred_check_branch
      %47 = sbr.rel (0) target = $region21
    $region20: #{actor_forward.1} parent=1 // pred_region
      %s49 = ssub.s32 4096, 4096
      %50 = vsyncadd [#allocation6], %s49
      %s51 = sshll.u32 [#allocation7], 4
      %s52 = int_to_ptr.vmem [resolvable:$true] %s51
      %57 = dma.hbm_to_vmem [thread:$0]  %s4, 4096, %s52, [#allocation6], 256, 256, 16
    $region21: #{actor_forward.1} parent=1 // pred_fallthru
      _
    // Predicated region
    $region22: #{actor_forward.1} parent=1 // pred_check
      _
    $region23: #{actor_forward.1} parent=1 // pred_check_branch
      %59 = sbr.rel (0) target = $region25
    $region24: #{actor_forward.1} parent=1 // pred_region
      %s61 = ssub.s32 4096, 4096
      %62 = vsyncadd [#allocation9], %s61
      %s63 = sshll.u32 [#allocation8], 4
      %s64 = int_to_ptr.vmem [resolvable:$true] %s63
      %69 = dma.hbm_to_vmem [thread:$0]  %s5, 4096, %s64, [#allocation9], 256, 256, 16
    $region25: #{actor_forward.1} parent=1 // pred_fallthru
      _
    // Predicated region
    $region26: #{actor_forward.1} parent=1 // pred_check
      _
    $region27: #{actor_forward.1} parent=1 // pred_check_branch
      %71 = sbr.rel (0) target = $region29
    $region28: #{actor_forward.1} parent=1 // pred_region
      _
    $region29: #{actor_forward.1} parent=1 // pred_fallthru
      _
    // Predicated region
    $region30: #{actor_forward.1} parent=1 // pred_check
      _
    $region31: #{actor_forward.1} parent=1 // pred_check_branch
      %73 = sbr.rel (0) target = $region33
    $region32: #{actor_forward.1} parent=1 // pred_region
      %s75 = ssub.s32 1024, 1024
      %76 = vsyncadd [#allocation9], %s75
      %s77 = sshll.u32 [#allocation10], 4
      %s78 = int_to_ptr.vmem [resolvable:$true] %s77
      %83 = dma.hbm_to_vmem [thread:$0]  %s7, 1024, %s78, [#allocation9], 64, 64, 4
    $region33: #{actor_forward.1} parent=1 // pred_fallthru
      _
    // Predicated region
    $region34: #{actor_forward.1} parent=1 // pred_check
      _
    $region35: #{actor_forward.1} parent=1 // pred_check_branch
      %85 = sbr.rel (0) target = $region37
    $region36: #{actor_forward.1} parent=1 // pred_region
      %s87 = ssub.s32 16, 16
      %88 = vsyncadd [#allocation12], %s87
      %s90 = sshll.u32 [#allocation11], 4
      %s91 = int_to_ptr.vmem [resolvable:$true] %s90
      %93 = dma.hbm_to_vmem [thread:$0]  %s8, 16, %s91, [#allocation12]
    $region37: #{actor_forward.1} parent=1 // pred_fallthru
      _
    // Predicated region
    $region38: #{actor_forward.1} parent=1 // pred_check
      _
    $region39: #{actor_forward.1} parent=1 // pred_check_branch
      %95 = sbr.rel (0) target = $region41
    $region40: #{actor_forward.1} parent=1 // pred_region
      %96 = dma.done [#allocation3], 128
    $region41: #{actor_forward.1} parent=1 // pred_fallthru
      _
    // Predicated region
    $region42: #{actor_forward.1} parent=1 // pred_check
      _
    $region43: #{actor_forward.1} parent=1 // pred_check_branch
      %98 = sbr.rel (0) target = $region45
    $region44: #{actor_forward.1} parent=1 // pred_region
      %99 = dma.done [#allocation6], 16
    $region45: #{actor_forward.1} parent=1 // pred_fallthru
      _
    // Predicated region
    $region46: #{actor_forward.1} parent=1 // pred_check
      _
    $region47: #{actor_forward.1} parent=1 // pred_check_branch
      %101 = sbr.rel (0) target = $region49
    $region48: #{actor_forward.1} parent=1 // pred_region
      %102 = dma.done [#allocation6], 4096
    $region49: #{actor_forward.1} parent=1 // pred_fallthru
      _
    // Predicated region
    $region50: #{actor_forward.1} parent=1 // pred_check
      _
    $region51: #{actor_forward.1} parent=1 // pred_check_branch
      %104 = sbr.rel (0) target = $region53
    $region52: #{actor_forward.1} parent=1 // pred_region
      %105 = dma.done [#allocation9], 4096
    $region53: #{actor_forward.1} parent=1 // pred_fallthru
      _
    // Predicated region
    $region54: #{actor_forward.1} parent=1 // pred_check
      _
    $region55: #{actor_forward.1} parent=1 // pred_check_branch
      %107 = sbr.rel (0) target = $region57
    $region56: #{actor_forward.1} parent=1 // pred_region
      %108 = dma.done [#allocation9], 1024
    $region57: #{actor_forward.1} parent=1 // pred_fallthru
      _
    // Predicated region
    $region58: #{actor_forward.1} parent=1 // pred_check
      _
    $region59: #{actor_forward.1} parent=1 // pred_check_branch
      %110 = sbr.rel (0) target = $region61
    $region60: #{actor_forward.1} parent=1 // pred_region
      %111 = dma.done [#allocation12], 16
    $region61: #{actor_forward.1} parent=1 // pred_fallthru
      _
    %v113 = vld [vmem:[%s0] sm:$0xff]
    %v114 = vld [vmem:[#allocation2] sm:$0xff]
    %v115 = vpack.c.bf16 %v113, %v113
    %v116 = vld [vmem:[%s2] sm:$0xf]
    %v117 = vld [vmem:[%s2 + $0x4] sm:$0xf]
    %v118 = vld [vmem:[#allocation5] sm:$0x1]
    %v120 = vlaneseq
    %v121 = vshrl.u32 %v120, 7
    %v122 = vsub.s32 0, %v121
    %v123 = vrot.slane %v118, %v122
    %v127 = vunpack.c.l.b16 %v116
    %v128 = vunpack.c.l.b16 %v117
    %v129 = vpack.c.b16 %v128, %v127
    %vm131 = vcmask 130048
    %v133 = vsel %vm131, %v115, 0
    %135 = vmatprep.subr.bf16.mxu0 0
    %136 = vmatpush1.bf16.msra.mxu0 0
    %137 = vmatprep.subr.bf16.mxu0 0
    %138 = vmatpush1.bf16.msra.mxu0 0
    %139 = vmatprep.subr.bf16.mxu0 0
    %140 = vmatpush1.bf16.msra.mxu0 0
    %141 = vmatprep.subr.bf16.mxu0 0
    %142 = vmatpush1.bf16.msra.mxu0 0
    %143 = vmatprep.subr.bf16.mxu0 0
    %144 = vmatpush1.bf16.msra.mxu0 0
    %145 = vmatprep.subr.bf16.mxu0 0
    %146 = vmatpush1.bf16.msra.mxu0 0
    %147 = vmatprep.subr.bf16.mxu0 0
    %148 = vmatpush1.bf16.msra.mxu0 0
    %149 = vmatprep.subr.bf16.mxu0 0
    %150 = vmatpush1.bf16.msra.mxu0 %v129
    %151 = vmatprep.subr.bf16.mxu0 0
    %152 = vmatpush2.bf16.msra.mxu0 0
    %153 = vmatprep.subr.bf16.mxu0 0
    %154 = vmatpush2.bf16.msra.mxu0 0
    %155 = vmatprep.subr.bf16.mxu0 0
    %156 = vmatpush2.bf16.msra.mxu0 0
    %157 = vmatprep.subr.bf16.mxu0 0
    %158 = vmatpush2.bf16.msra.mxu0 0
    %159 = vmatprep.subr.bf16.mxu0 0
    %160 = vmatpush2.bf16.msra.mxu0 0
    %161 = vmatprep.subr.bf16.mxu0 0
    %162 = vmatpush2.bf16.msra.mxu0 0
    %163 = vmatprep.subr.bf16.mxu0 0
    %164 = vmatpush2.bf16.msra.mxu0 0
    %165 = vmatprep.subr.bf16.mxu0 0
    %166 = vmatpush2.bf16.msra.mxu0 0
    %167 = vmatprep.mubr.bf16.mxu0 0
    %168 = vmatmul.mubr.bf16.gmra.mxu0 %v133
    %v169 = vpop.f32.mrf.mxu0
    %v170 = vadd.f32 %v123, %v169
    %v171 = vpop.f32.mrf.mxu0
    %v172 = vpop.f32.mrf.mxu0
    %v173 = vpop.f32.mrf.mxu0
    %174 = vdwg.mxu0
    %v175 = vxor.u32 %v170, 2147483648
    %v176 = vmul.f32 %v175, 1.442695
    %v177 = vpow.pop %v176
    %v178 = vadd.f32 %v177, 1.0
    %v179 = vrcp.pop %v178
    %v180 = vmul.f32 1.0, %v179
    %v181 = vmul.f32 %v170, %v180
    %v182 = vpack.c.bf16 %v181, %v181
    %v183 = vld [vmem:[#allocation7] sm:$0xff]
    %v184 = vld [vmem:[#allocation7 + $0x8] sm:$0xff]
    %v185 = vld [vmem:[#allocation7 + $0x10] sm:$0xff]
    %v186 = vld [vmem:[#allocation7 + $0x18] sm:$0xff]
    %v187 = vld [vmem:[#allocation7 + $0x20] sm:$0xff]
    %v188 = vld [vmem:[#allocation7 + $0x28] sm:$0xff]
    %v189 = vld [vmem:[#allocation7 + $0x30] sm:$0xff]
    %v190 = vld [vmem:[#allocation7 + $0x38] sm:$0xff]
    %v191 = vld [vmem:[#allocation7 + $0x40] sm:$0xff]
    %v192 = vld [vmem:[#allocation7 + $0x48] sm:$0xff]
    %v193 = vld [vmem:[#allocation7 + $0x50] sm:$0xff]
    %v194 = vld [vmem:[#allocation7 + $0x58] sm:$0xff]
    %v195 = vld [vmem:[#allocation7 + $0x60] sm:$0xff]
    %v196 = vld [vmem:[#allocation7 + $0x68] sm:$0xff]
    %v197 = vld [vmem:[#allocation7 + $0x70] sm:$0xff]
    %v198 = vld [vmem:[#allocation7 + $0x78] sm:$0xff]
    %v199 = vld [vmem:[#allocation7 + $0x80] sm:$0xff]
    %v200 = vld [vmem:[#allocation7 + $0x88] sm:$0xff]
    %v201 = vld [vmem:[#allocation7 + $0x90] sm:$0xff]
    %v202 = vld [vmem:[#allocation7 + $0x98] sm:$0xff]
    %v203 = vld [vmem:[#allocation7 + $0xa0] sm:$0xff]
    %v204 = vld [vmem:[#allocation7 + $0xa8] sm:$0xff]
    %v205 = vld [vmem:[#allocation7 + $0xb0] sm:$0xff]
    %v206 = vld [vmem:[#allocation7 + $0xb8] sm:$0xff]
    %v207 = vld [vmem:[#allocation7 + $0xc0] sm:$0xff]
    %v208 = vld [vmem:[#allocation7 + $0xc8] sm:$0xff]
    %v209 = vld [vmem:[#allocation7 + $0xd0] sm:$0xff]
    %v210 = vld [vmem:[#allocation7 + $0xd8] sm:$0xff]
    %v211 = vld [vmem:[#allocation7 + $0xe0] sm:$0xff]
    %v212 = vld [vmem:[#allocation7 + $0xe8] sm:$0xff]
    %v213 = vld [vmem:[#allocation7 + $0xf0] sm:$0xff]
    %v214 = vld [vmem:[#allocation7 + $0xf8] sm:$0xff]
    %v215 = vpack.c.bf16 %v114, %v114
    %v216 = vld [vmem:[#allocation8] sm:$0xff]
    %v217 = vld [vmem:[#allocation8 + $0x8] sm:$0xff]
    %v218 = vld [vmem:[#allocation8 + $0x10] sm:$0xff]
    %v219 = vld [vmem:[#allocation8 + $0x18] sm:$0xff]
    %v220 = vld [vmem:[#allocation8 + $0x20] sm:$0xff]
    %v221 = vld [vmem:[#allocation8 + $0x28] sm:$0xff]
    %v222 = vld [vmem:[#allocation8 + $0x30] sm:$0xff]
    %v223 = vld [vmem:[#allocation8 + $0x38] sm:$0xff]
    %v224 = vld [vmem:[#allocation8 + $0x40] sm:$0xff]
    %v225 = vld [vmem:[#allocation8 + $0x48] sm:$0xff]
    %v226 = vld [vmem:[#allocation8 + $0x50] sm:$0xff]
    %v227 = vld [vmem:[#allocation8 + $0x58] sm:$0xff]
    %v228 = vld [vmem:[#allocation8 + $0x60] sm:$0xff]
    %v229 = vld [vmem:[#allocation8 + $0x68] sm:$0xff]
    %v230 = vld [vmem:[#allocation8 + $0x70] sm:$0xff]
    %v231 = vld [vmem:[#allocation8 + $0x78] sm:$0xff]
    %v232 = vld [vmem:[#allocation8 + $0x80] sm:$0xff]
    %v233 = vld [vmem:[#allocation8 + $0x88] sm:$0xff]
    %v234 = vld [vmem:[#allocation8 + $0x90] sm:$0xff]
    %v235 = vld [vmem:[#allocation8 + $0x98] sm:$0xff]
    %v236 = vld [vmem:[#allocation8 + $0xa0] sm:$0xff]
    %v237 = vld [vmem:[#allocation8 + $0xa8] sm:$0xff]
    %v238 = vld [vmem:[#allocation8 + $0xb0] sm:$0xff]
    %v239 = vld [vmem:[#allocation8 + $0xb8] sm:$0xff]
    %v240 = vld [vmem:[#allocation8 + $0xc0] sm:$0xff]
    %v241 = vld [vmem:[#allocation8 + $0xc8] sm:$0xff]
    %v242 = vld [vmem:[#allocation8 + $0xd0] sm:$0xff]
    %v243 = vld [vmem:[#allocation8 + $0xd8] sm:$0xff]
    %v244 = vld [vmem:[#allocation8 + $0xe0] sm:$0xff]
    %v245 = vld [vmem:[#allocation8 + $0xe8] sm:$0xff]
    %v246 = vld [vmem:[#allocation8 + $0xf0] sm:$0xff]
    %v247 = vld [vmem:[#allocation8 + $0xf8] sm:$0xff]
    %v280 = vunpack.c.l.b16 %v216
    %v281 = vunpack.c.h.b16 %v216
    %v282 = vunpack.c.l.b16 %v217
    %v283 = vunpack.c.h.b16 %v217
    %v284 = vunpack.c.l.b16 %v218
    %v285 = vunpack.c.h.b16 %v218
    %v286 = vunpack.c.l.b16 %v219
    %v287 = vunpack.c.h.b16 %v219
    %v288 = vunpack.c.l.b16 %v220
    %v289 = vunpack.c.h.b16 %v220
    %v290 = vunpack.c.l.b16 %v221
    %v291 = vunpack.c.h.b16 %v221
    %v292 = vunpack.c.l.b16 %v222
    %v293 = vunpack.c.h.b16 %v222
    %v294 = vunpack.c.l.b16 %v223
    %v295 = vunpack.c.h.b16 %v223
    %v296 = vunpack.c.l.b16 %v224
    %v297 = vunpack.c.h.b16 %v224
    %v298 = vunpack.c.l.b16 %v225
    %v299 = vunpack.c.h.b16 %v225
    %v300 = vunpack.c.l.b16 %v226
    %v301 = vunpack.c.h.b16 %v226
    %v302 = vunpack.c.l.b16 %v227
    %v303 = vunpack.c.h.b16 %v227
    %v304 = vunpack.c.l.b16 %v228
    %v305 = vunpack.c.h.b16 %v228
    %v306 = vunpack.c.l.b16 %v229
    %v307 = vunpack.c.h.b16 %v229
    %v308 = vunpack.c.l.b16 %v230
    %v309 = vunpack.c.h.b16 %v230
    %v310 = vunpack.c.l.b16 %v231
    %v311 = vunpack.c.h.b16 %v231
    %v312 = vunpack.c.l.b16 %v232
    %v313 = vunpack.c.h.b16 %v232
    %v314 = vunpack.c.l.b16 %v233
    %v315 = vunpack.c.h.b16 %v233
    %v316 = vunpack.c.l.b16 %v234
    %v317 = vunpack.c.h.b16 %v234
    %v318 = vunpack.c.l.b16 %v235
    %v319 = vunpack.c.h.b16 %v235
    %v320 = vunpack.c.l.b16 %v236
    %v321 = vunpack.c.h.b16 %v236
    %v322 = vunpack.c.l.b16 %v237
    %v323 = vunpack.c.h.b16 %v237
    %v324 = vunpack.c.l.b16 %v238
    %v325 = vunpack.c.h.b16 %v238
    %v326 = vunpack.c.l.b16 %v239
    %v327 = vunpack.c.h.b16 %v239
    %v328 = vunpack.c.l.b16 %v240
    %v329 = vunpack.c.h.b16 %v240
    %v330 = vunpack.c.l.b16 %v241
    %v331 = vunpack.c.h.b16 %v241
    %v332 = vunpack.c.l.b16 %v242
    %v333 = vunpack.c.h.b16 %v242
    %v334 = vunpack.c.l.b16 %v243
    %v335 = vunpack.c.h.b16 %v243
    %v336 = vunpack.c.l.b16 %v244
    %v337 = vunpack.c.h.b16 %v244
    %v338 = vunpack.c.l.b16 %v245
    %v339 = vunpack.c.h.b16 %v245
    %v340 = vunpack.c.l.b16 %v246
    %v341 = vunpack.c.h.b16 %v246
    %v342 = vunpack.c.l.b16 %v247
    %v343 = vunpack.c.h.b16 %v247
    %v344 = vpack.c.b16 %v284, %v280
    %v345 = vpack.c.b16 %v285, %v281
    %v346 = vpack.c.b16 %v286, %v282
    %v347 = vpack.c.b16 %v287, %v283
    %v348 = vpack.c.b16 %v292, %v288
    %v349 = vpack.c.b16 %v293, %v289
    %v350 = vpack.c.b16 %v294, %v290
    %v351 = vpack.c.b16 %v295, %v291
    %v352 = vpack.c.b16 %v300, %v296
    %v353 = vpack.c.b16 %v301, %v297
    %v354 = vpack.c.b16 %v302, %v298
    %v355 = vpack.c.b16 %v303, %v299
    %v356 = vpack.c.b16 %v308, %v304
    %v357 = vpack.c.b16 %v309, %v305
    %v358 = vpack.c.b16 %v310, %v306
    %v359 = vpack.c.b16 %v311, %v307
    %v360 = vpack.c.b16 %v316, %v312
    %v361 = vpack.c.b16 %v317, %v313
    %v362 = vpack.c.b16 %v318, %v314
    %v363 = vpack.c.b16 %v319, %v315
    %v364 = vpack.c.b16 %v324, %v320
    %v365 = vpack.c.b16 %v325, %v321
    %v366 = vpack.c.b16 %v326, %v322
    %v367 = vpack.c.b16 %v327, %v323
    %v368 = vpack.c.b16 %v332, %v328
    %v369 = vpack.c.b16 %v333, %v329
    %v370 = vpack.c.b16 %v334, %v330
    %v371 = vpack.c.b16 %v335, %v331
    %v372 = vpack.c.b16 %v340, %v336
    %v373 = vpack.c.b16 %v341, %v337
    %v374 = vpack.c.b16 %v342, %v338
    %v375 = vpack.c.b16 %v343, %v339
    %408 = vmatprep.subr.bf16.mxu0 %v373
    %409 = vmatpush1.bf16.msra.mxu0 %v372
    %410 = vmatprep.subr.bf16.mxu0 %v369
    %411 = vmatpush1.bf16.msra.mxu0 %v368
    %412 = vmatprep.subr.bf16.mxu0 %v365
    %413 = vmatpush1.bf16.msra.mxu0 %v364
    %414 = vmatprep.subr.bf16.mxu0 %v361
    %415 = vmatpush1.bf16.msra.mxu0 %v360
    %416 = vmatprep.subr.bf16.mxu0 %v357
    %417 = vmatpush1.bf16.msra.mxu0 %v356
    %418 = vmatprep.subr.bf16.mxu0 %v353
    %419 = vmatpush1.bf16.msra.mxu0 %v352
    %420 = vmatprep.subr.bf16.mxu0 %v349
    %421 = vmatpush1.bf16.msra.mxu0 %v348
    %422 = vmatprep.subr.bf16.mxu0 %v345
    %423 = vmatpush1.bf16.msra.mxu0 %v344
    %424 = vmatprep.subr.bf16.mxu0 0
    %425 = vmatpush2.bf16.msra.mxu0 0
    %426 = vmatprep.subr.bf16.mxu0 0
    %427 = vmatpush2.bf16.msra.mxu0 0
    %428 = vmatprep.subr.bf16.mxu0 0
    %429 = vmatpush2.bf16.msra.mxu0 0
    %430 = vmatprep.subr.bf16.mxu0 0
    %431 = vmatpush2.bf16.msra.mxu0 0
    %432 = vmatprep.subr.bf16.mxu0 0
    %433 = vmatpush2.bf16.msra.mxu0 0
    %434 = vmatprep.subr.bf16.mxu0 0
    %435 = vmatpush2.bf16.msra.mxu0 0
    %436 = vmatprep.subr.bf16.mxu0 0
    %437 = vmatpush2.bf16.msra.mxu0 0
    %438 = vmatprep.subr.bf16.mxu0 0
    %439 = vmatpush2.bf16.msra.mxu0 0
    %440 = vmatprep.mubr.bf16.mxu0 0
    %441 = vmatmul.mubr.bf16.gmra.mxu0 %v215
    %v442 = vpop.f32.mrf.mxu0
    %v443 = vadd.f32 0.0, %v442
    %v444 = vpop.f32.mrf.mxu0
    %v445 = vadd.f32 0.0, %v444
    %v446 = vpop.f32.mrf.mxu0
    %v447 = vpop.f32.mrf.mxu0
    %448 = vdwg.mxu0
    %449 = vmatprep.subr.bf16.mxu0 %v375
    %450 = vmatpush1.bf16.msra.mxu0 %v374
    %451 = vmatprep.subr.bf16.mxu0 %v371
    %452 = vmatpush1.bf16.msra.mxu0 %v370
    %453 = vmatprep.subr.bf16.mxu0 %v367
    %454 = vmatpush1.bf16.msra.mxu0 %v366
    %455 = vmatprep.subr.bf16.mxu0 %v363
    %456 = vmatpush1.bf16.msra.mxu0 %v362
    %457 = vmatprep.subr.bf16.mxu0 %v359
    %458 = vmatpush1.bf16.msra.mxu0 %v358
    %459 = vmatprep.subr.bf16.mxu0 %v355
    %460 = vmatpush1.bf16.msra.mxu0 %v354
    %461 = vmatprep.subr.bf16.mxu0 %v351
    %462 = vmatpush1.bf16.msra.mxu0 %v350
    %463 = vmatprep.subr.bf16.mxu0 %v347
    %464 = vmatpush1.bf16.msra.mxu0 %v346
    %465 = vmatprep.subr.bf16.mxu0 0
    %466 = vmatpush2.bf16.msra.mxu0 0
    %467 = vmatprep.subr.bf16.mxu0 0
    %468 = vmatpush2.bf16.msra.mxu0 0
    %469 = vmatprep.subr.bf16.mxu0 0
    %470 = vmatpush2.bf16.msra.mxu0 0
    %471 = vmatprep.subr.bf16.mxu0 0
    %472 = vmatpush2.bf16.msra.mxu0 0
    %473 = vmatprep.subr.bf16.mxu0 0
    %474 = vmatpush2.bf16.msra.mxu0 0
    %475 = vmatprep.subr.bf16.mxu0 0
    %476 = vmatpush2.bf16.msra.mxu0 0
    %477 = vmatprep.subr.bf16.mxu0 0
    %478 = vmatpush2.bf16.msra.mxu0 0
    %479 = vmatprep.subr.bf16.mxu0 0
    %480 = vmatpush2.bf16.msra.mxu0 0
    %481 = vmatprep.mubr.bf16.mxu0 0
    %482 = vmatmul.mubr.bf16.gmra.mxu0 %v215
    %v483 = vpop.f32.mrf.mxu0
    %v484 = vadd.f32 0.0, %v483
    %v485 = vpop.f32.mrf.mxu0
    %v486 = vadd.f32 0.0, %v485
    %v487 = vpop.f32.mrf.mxu0
    %v488 = vpop.f32.mrf.mxu0
    %489 = vdwg.mxu0
    %v522 = vunpack.c.l.b16 %v183
    %v523 = vunpack.c.h.b16 %v183
    %v524 = vunpack.c.l.b16 %v184
    %v525 = vunpack.c.h.b16 %v184
    %v526 = vunpack.c.l.b16 %v185
    %v527 = vunpack.c.h.b16 %v185
    %v528 = vunpack.c.l.b16 %v186
    %v529 = vunpack.c.h.b16 %v186
    %v530 = vunpack.c.l.b16 %v187
    %v531 = vunpack.c.h.b16 %v187
    %v532 = vunpack.c.l.b16 %v188
    %v533 = vunpack.c.h.b16 %v188
    %v534 = vunpack.c.l.b16 %v189
    %v535 = vunpack.c.h.b16 %v189
    %v536 = vunpack.c.l.b16 %v190
    %v537 = vunpack.c.h.b16 %v190
    %v538 = vunpack.c.l.b16 %v191
    %v539 = vunpack.c.h.b16 %v191
    %v540 = vunpack.c.l.b16 %v192
    %v541 = vunpack.c.h.b16 %v192
    %v542 = vunpack.c.l.b16 %v193
    %v543 = vunpack.c.h.b16 %v193
    %v544 = vunpack.c.l.b16 %v194
    %v545 = vunpack.c.h.b16 %v194
    %v546 = vunpack.c.l.b16 %v195
    %v547 = vunpack.c.h.b16 %v195
    %v548 = vunpack.c.l.b16 %v196
    %v549 = vunpack.c.h.b16 %v196
    %v550 = vunpack.c.l.b16 %v197
    %v551 = vunpack.c.h.b16 %v197
    %v552 = vunpack.c.l.b16 %v198
    %v553 = vunpack.c.h.b16 %v198
    %v554 = vunpack.c.l.b16 %v199
    %v555 = vunpack.c.h.b16 %v199
    %v556 = vunpack.c.l.b16 %v200
    %v557 = vunpack.c.h.b16 %v200
    %v558 = vunpack.c.l.b16 %v201
    %v559 = vunpack.c.h.b16 %v201
    %v560 = vunpack.c.l.b16 %v202
    %v561 = vunpack.c.h.b16 %v202
    %v562 = vunpack.c.l.b16 %v203
    %v563 = vunpack.c.h.b16 %v203
    %v564 = vunpack.c.l.b16 %v204
    %v565 = vunpack.c.h.b16 %v204
    %v566 = vunpack.c.l.b16 %v205
    %v567 = vunpack.c.h.b16 %v205
    %v568 = vunpack.c.l.b16 %v206
    %v569 = vunpack.c.h.b16 %v206
    %v570 = vunpack.c.l.b16 %v207
    %v571 = vunpack.c.h.b16 %v207
    %v572 = vunpack.c.l.b16 %v208
    %v573 = vunpack.c.h.b16 %v208
    %v574 = vunpack.c.l.b16 %v209
    %v575 = vunpack.c.h.b16 %v209
    %v576 = vunpack.c.l.b16 %v210
    %v577 = vunpack.c.h.b16 %v210
    %v578 = vunpack.c.l.b16 %v211
    %v579 = vunpack.c.h.b16 %v211
    %v580 = vunpack.c.l.b16 %v212
    %v581 = vunpack.c.h.b16 %v212
    %v582 = vunpack.c.l.b16 %v213
    %v583 = vunpack.c.h.b16 %v213
    %v584 = vunpack.c.l.b16 %v214
    %v585 = vunpack.c.h.b16 %v214
    %v586 = vpack.c.b16 %v526, %v522
    %v587 = vpack.c.b16 %v527, %v523
    %v588 = vpack.c.b16 %v528, %v524
    %v589 = vpack.c.b16 %v529, %v525
    %v590 = vpack.c.b16 %v534, %v530
    %v591 = vpack.c.b16 %v535, %v531
    %v592 = vpack.c.b16 %v536, %v532
    %v593 = vpack.c.b16 %v537, %v533
    %v594 = vpack.c.b16 %v542, %v538
    %v595 = vpack.c.b16 %v543, %v539
    %v596 = vpack.c.b16 %v544, %v540
    %v597 = vpack.c.b16 %v545, %v541
    %v598 = vpack.c.b16 %v550, %v546
    %v599 = vpack.c.b16 %v551, %v547
    %v600 = vpack.c.b16 %v552, %v548
    %v601 = vpack.c.b16 %v553, %v549
    %v602 = vpack.c.b16 %v558, %v554
    %v603 = vpack.c.b16 %v559, %v555
    %v604 = vpack.c.b16 %v560, %v556
    %v605 = vpack.c.b16 %v561, %v557
    %v606 = vpack.c.b16 %v566, %v562
    %v607 = vpack.c.b16 %v567, %v563
    %v608 = vpack.c.b16 %v568, %v564
    %v609 = vpack.c.b16 %v569, %v565
    %v610 = vpack.c.b16 %v574, %v570
    %v611 = vpack.c.b16 %v575, %v571
    %v612 = vpack.c.b16 %v576, %v572
    %v613 = vpack.c.b16 %v577, %v573
    %v614 = vpack.c.b16 %v582, %v578
    %v615 = vpack.c.b16 %v583, %v579
    %v616 = vpack.c.b16 %v584, %v580
    %v617 = vpack.c.b16 %v585, %v581
    %650 = vmatprep.subr.bf16.mxu0 %v615
    %651 = vmatpush1.bf16.msra.mxu0 %v614
    %652 = vmatprep.subr.bf16.mxu0 %v611
    %653 = vmatpush1.bf16.msra.mxu0 %v610
    %654 = vmatprep.subr.bf16.mxu0 %v607
    %655 = vmatpush1.bf16.msra.mxu0 %v606
    %656 = vmatprep.subr.bf16.mxu0 %v603
    %657 = vmatpush1.bf16.msra.mxu0 %v602
    %658 = vmatprep.subr.bf16.mxu0 %v599
    %659 = vmatpush1.bf16.msra.mxu0 %v598
    %660 = vmatprep.subr.bf16.mxu0 %v595
    %661 = vmatpush1.bf16.msra.mxu0 %v594
    %662 = vmatprep.subr.bf16.mxu0 %v591
    %663 = vmatpush1.bf16.msra.mxu0 %v590
    %664 = vmatprep.subr.bf16.mxu0 %v587
    %665 = vmatpush1.bf16.msra.mxu0 %v586
    %666 = vmatprep.subr.bf16.mxu0 0
    %667 = vmatpush2.bf16.msra.mxu0 0
    %668 = vmatprep.subr.bf16.mxu0 0
    %669 = vmatpush2.bf16.msra.mxu0 0
    %670 = vmatprep.subr.bf16.mxu0 0
    %671 = vmatpush2.bf16.msra.mxu0 0
    %672 = vmatprep.subr.bf16.mxu0 0
    %673 = vmatpush2.bf16.msra.mxu0 0
    %674 = vmatprep.subr.bf16.mxu0 0
    %675 = vmatpush2.bf16.msra.mxu0 0
    %676 = vmatprep.subr.bf16.mxu0 0
    %677 = vmatpush2.bf16.msra.mxu0 0
    %678 = vmatprep.subr.bf16.mxu0 0
    %679 = vmatpush2.bf16.msra.mxu0 0
    %680 = vmatprep.subr.bf16.mxu0 0
    %681 = vmatpush2.bf16.msra.mxu0 0
    %682 = vmatprep.mubr.bf16.mxu0 0
    %683 = vmatmul.mubr.bf16.gmra.mxu0 %v182
    %v684 = vpop.f32.mrf.mxu0
    %v685 = vadd.f32 %v443, %v684
    %v686 = vpop.f32.mrf.mxu0
    %v687 = vadd.f32 %v445, %v686
    %v688 = vpop.f32.mrf.mxu0
    %v689 = vpop.f32.mrf.mxu0
    %690 = vdwg.mxu0
    %691 = vmatprep.subr.bf16.mxu0 %v617
    %692 = vmatpush1.bf16.msra.mxu0 %v616
    %693 = vmatprep.subr.bf16.mxu0 %v613
    %694 = vmatpush1.bf16.msra.mxu0 %v612
    %695 = vmatprep.subr.bf16.mxu0 %v609
    %696 = vmatpush1.bf16.msra.mxu0 %v608
    %697 = vmatprep.subr.bf16.mxu0 %v605
    %698 = vmatpush1.bf16.msra.mxu0 %v604
    %699 = vmatprep.subr.bf16.mxu0 %v601
    %700 = vmatpush1.bf16.msra.mxu0 %v600
    %701 = vmatprep.subr.bf16.mxu0 %v597
    %702 = vmatpush1.bf16.msra.mxu0 %v596
    %703 = vmatprep.subr.bf16.mxu0 %v593
    %704 = vmatpush1.bf16.msra.mxu0 %v592
    %705 = vmatprep.subr.bf16.mxu0 %v589
    %706 = vmatpush1.bf16.msra.mxu0 %v588
    %707 = vmatprep.subr.bf16.mxu0 0
    %708 = vmatpush2.bf16.msra.mxu0 0
    %709 = vmatprep.subr.bf16.mxu0 0
    %710 = vmatpush2.bf16.msra.mxu0 0
    %711 = vmatprep.subr.bf16.mxu0 0
    %712 = vmatpush2.bf16.msra.mxu0 0
    %713 = vmatprep.subr.bf16.mxu0 0
    %714 = vmatpush2.bf16.msra.mxu0 0
    %715 = vmatprep.subr.bf16.mxu0 0
    %716 = vmatpush2.bf16.msra.mxu0 0
    %717 = vmatprep.subr.bf16.mxu0 0
    %718 = vmatpush2.bf16.msra.mxu0 0
    %719 = vmatprep.subr.bf16.mxu0 0
    %720 = vmatpush2.bf16.msra.mxu0 0
    %721 = vmatprep.subr.bf16.mxu0 0
    %722 = vmatpush2.bf16.msra.mxu0 0
    %723 = vmatprep.mubr.bf16.mxu0 0
    %724 = vmatmul.mubr.bf16.gmra.mxu0 %v182
    %v725 = vpop.f32.mrf.mxu0
    %v726 = vadd.f32 %v484, %v725
    %v727 = vpop.f32.mrf.mxu0
    %v728 = vadd.f32 %v486, %v727
    %v729 = vpop.f32.mrf.mxu0
    %v730 = vpop.f32.mrf.mxu0
    %731 = vdwg.mxu0
    %v732 = vld [vmem:[%s6] sm:$0xf]
    %v734 = vlaneseq
    %v735 = vshrl.u32 %v734, 7
    %v736 = vsub.s32 0, %v735
    %v737 = vrot.slane %v732, %v736
    %v738 = vlaneseq
    %v739 = vshrl.u32 %v738, 7
    %v740 = vsub.s32 1, %v739
    %v741 = vrot.slane %v732, %v740
    %v742 = vlaneseq
    %v743 = vshrl.u32 %v742, 7
    %v744 = vsub.s32 2, %v743
    %v745 = vrot.slane %v732, %v744
    %v746 = vlaneseq
    %v747 = vshrl.u32 %v746, 7
    %v748 = vsub.s32 3, %v747
    %v749 = vrot.slane %v732, %v748
    %v754 = vadd.f32 %v685, %v737
    %v755 = vadd.f32 %v687, %v741
    %v756 = vadd.f32 %v726, %v745
    %v757 = vadd.f32 %v728, %v749
    %v758 = vxor.u32 %v754, 2147483648
    %v759 = vmul.f32 %v758, 1.442695
    %v760 = vpow.pop %v759
    %v761 = vadd.f32 %v760, 1.0
    %v762 = vrcp.pop %v761
    %v763 = vmul.f32 1.0, %v762
    %v764 = vxor.u32 %v755, 2147483648
    %v765 = vmul.f32 %v764, 1.442695
    %v766 = vpow.pop %v765
    %v767 = vadd.f32 %v766, 1.0
    %v768 = vrcp.pop %v767
    %v769 = vmul.f32 1.0, %v768
    %v770 = vmul.f32 %v763, %v757
    %v771 = vadd.f32 %v756, %v770
    %v772 = vtanh.pop %v771
    %v773 = vsub.f32 1.0, %v769
    %v774 = vmul.f32 %v773, %v772
    %v775 = vmul.f32 %v769, %v114
    %v776 = vadd.f32 %v774, %v775
    %v777 = vpack.c.bf16 %v776, %v776
    %v778 = vld [vmem:[#allocation10] sm:$0xf]
    %v779 = vld [vmem:[#allocation10 + $0x4] sm:$0xf]
    %v780 = vld [vmem:[#allocation10 + $0x8] sm:$0xf]
    %v781 = vld [vmem:[#allocation10 + $0xc] sm:$0xf]
    %v782 = vld [vmem:[#allocation10 + $0x10] sm:$0xf]
    %v783 = vld [vmem:[#allocation10 + $0x14] sm:$0xf]
    %v784 = vld [vmem:[#allocation10 + $0x18] sm:$0xf]
    %v785 = vld [vmem:[#allocation10 + $0x1c] sm:$0xf]
    %v786 = vld [vmem:[#allocation10 + $0x20] sm:$0xf]
    %v787 = vld [vmem:[#allocation10 + $0x24] sm:$0xf]
    %v788 = vld [vmem:[#allocation10 + $0x28] sm:$0xf]
    %v789 = vld [vmem:[#allocation10 + $0x2c] sm:$0xf]
    %v790 = vld [vmem:[#allocation10 + $0x30] sm:$0xf]
    %v791 = vld [vmem:[#allocation10 + $0x34] sm:$0xf]
    %v792 = vld [vmem:[#allocation10 + $0x38] sm:$0xf]
    %v793 = vld [vmem:[#allocation10 + $0x3c] sm:$0xf]
    %v794 = vld [vmem:[#allocation11] sm:$0x1]
    %v796 = vlaneseq
    %v797 = vshrl.u32 %v796, 7
    %v798 = vsub.s32 0, %v797
    %v799 = vrot.slane %v794, %v798
    %v817 = vunpack.c.l.b16 %v778
    %v818 = vunpack.c.l.b16 %v779
    %v819 = vunpack.c.l.b16 %v780
    %v820 = vunpack.c.l.b16 %v781
    %v821 = vunpack.c.l.b16 %v782
    %v822 = vunpack.c.l.b16 %v783
    %v823 = vunpack.c.l.b16 %v784
    %v824 = vunpack.c.l.b16 %v785
    %v825 = vunpack.c.l.b16 %v786
    %v826 = vunpack.c.l.b16 %v787
    %v827 = vunpack.c.l.b16 %v788
    %v828 = vunpack.c.l.b16 %v789
    %v829 = vunpack.c.l.b16 %v790
    %v830 = vunpack.c.l.b16 %v791
    %v831 = vunpack.c.l.b16 %v792
    %v832 = vunpack.c.l.b16 %v793
    %v833 = vpack.c.b16 %v818, %v817
    %v834 = vpack.c.b16 %v820, %v819
    %v835 = vpack.c.b16 %v822, %v821
    %v836 = vpack.c.b16 %v824, %v823
    %v837 = vpack.c.b16 %v826, %v825
    %v838 = vpack.c.b16 %v828, %v827
    %v839 = vpack.c.b16 %v830, %v829
    %v840 = vpack.c.b16 %v832, %v831
    %849 = vmatprep.subr.bf16.mxu0 0
    %850 = vmatpush1.bf16.msra.mxu0 %v840
    %851 = vmatprep.subr.bf16.mxu0 0
    %852 = vmatpush1.bf16.msra.mxu0 %v839
    %853 = vmatprep.subr.bf16.mxu0 0
    %854 = vmatpush1.bf16.msra.mxu0 %v838
    %855 = vmatprep.subr.bf16.mxu0 0
    %856 = vmatpush1.bf16.msra.mxu0 %v837
    %857 = vmatprep.subr.bf16.mxu0 0
    %858 = vmatpush1.bf16.msra.mxu0 %v836
    %859 = vmatprep.subr.bf16.mxu0 0
    %860 = vmatpush1.bf16.msra.mxu0 %v835
    %861 = vmatprep.subr.bf16.mxu0 0
    %862 = vmatpush1.bf16.msra.mxu0 %v834
    %863 = vmatprep.subr.bf16.mxu0 0
    %864 = vmatpush1.bf16.msra.mxu0 %v833
    %865 = vmatprep.subr.bf16.mxu0 0
    %866 = vmatpush2.bf16.msra.mxu0 0
    %867 = vmatprep.subr.bf16.mxu0 0
    %868 = vmatpush2.bf16.msra.mxu0 0
    %869 = vmatprep.subr.bf16.mxu0 0
    %870 = vmatpush2.bf16.msra.mxu0 0
    %871 = vmatprep.subr.bf16.mxu0 0
    %872 = vmatpush2.bf16.msra.mxu0 0
    %873 = vmatprep.subr.bf16.mxu0 0
    %874 = vmatpush2.bf16.msra.mxu0 0
    %875 = vmatprep.subr.bf16.mxu0 0
    %876 = vmatpush2.bf16.msra.mxu0 0
    %877 = vmatprep.subr.bf16.mxu0 0
    %878 = vmatpush2.bf16.msra.mxu0 0
    %879 = vmatprep.subr.bf16.mxu0 0
    %880 = vmatpush2.bf16.msra.mxu0 0
    %881 = vmatprep.mubr.bf16.mxu0 0
    %882 = vmatmul.mubr.bf16.gmra.mxu0 %v777
    %v883 = vpop.f32.mrf.mxu0
    %v884 = vadd.f32 %v799, %v883
    %v885 = vpop.f32.mrf.mxu0
    %v886 = vpop.f32.mrf.mxu0
    %v887 = vpop.f32.mrf.mxu0
    %888 = vdwg.mxu0
    %889 = vmax.xlane.f32.xlu0 %v884
    %v890 = vpop.xlane.xlu0 %889
    %v891 = vsub.f32 %v884, %v890
    %v892 = vmul.f32 %v891, 1.442695
    %v893 = vpow.pop %v892
    %894 = vadd.xlane.f32.xlu0 %v893
    %v895 = vpop.xlane.xlu0 %894
    %v896 = vrcp.pop %v895
    %v897 = vmul.f32 %v895, %v896
    %v898 = vsub.f32 2.0, %v897
    %v899 = vmul.f32 %v896, %v898
    %v900 = vmul.f32 %v893, %v899
    %901 = vst [vmem:[#allocation13] sm:$0xff] %v900
    %902 = vst [vmem:[#allocation14] sm:$0xff] %v776
    // Predicated region
    $region62: #{actor_forward.1} parent=1 // pred_check
      _
    $region63: #{actor_forward.1} parent=1 // pred_check_branch
      %904 = sbr.rel (0) target = $region65
    $region64: #{actor_forward.1} parent=1 // pred_region
      %s906 = ssub.s32 128, 128
      %907 = vsyncadd [#allocation4], %s906
      %s909 = sshll.u32 [#allocation13], 4
      %s910 = int_to_ptr.vmem [resolvable:$true] %s909
      %912 = dma.vmem_to_hbm [thread:$0]  %s910, 128, %s9, [#allocation4]
    $region65: #{actor_forward.1} parent=1 // pred_fallthru
      _
    // Predicated region
    $region66: #{actor_forward.1} parent=1 // pred_check
      _
    $region67: #{actor_forward.1} parent=1 // pred_check_branch
      %914 = sbr.rel (0) target = $region69
    $region68: #{actor_forward.1} parent=1 // pred_region
      %s916 = ssub.s32 128, 128
      %917 = vsyncadd [#allocation15], %s916
      %s919 = sshll.u32 [#allocation14], 4
      %s920 = int_to_ptr.vmem [resolvable:$true] %s919
      %922 = dma.vmem_to_hbm [thread:$0]  %s920, 128, %s10, [#allocation15]
    $region69: #{actor_forward.1} parent=1 // pred_fallthru
      _
    // Predicated region
    $region70: #{actor_forward.1} parent=1 // pred_check
      _
    $region71: #{actor_forward.1} parent=1 // pred_check_branch
      %924 = sbr.rel (0) target = $region73
    $region72: #{actor_forward.1} parent=1 // pred_region
      %925 = dma.done [#allocation4], 128
    $region73: #{actor_forward.1} parent=1 // pred_fallthru
      _
    // Predicated region
    $region74: #{actor_forward.1} parent=1 // pred_check
      _
    $region75: #{actor_forward.1} parent=1 // pred_check_branch
      %927 = sbr.rel (0) target = $region77
    $region76: #{actor_forward.1} parent=1 // pred_region
      %928 = dma.done [#allocation15], 128
    $region77: #{actor_forward.1} parent=1 // pred_fallthru
      _
    %929 = vsyncpa [#allocation3], 1
    %930 = vsyncpa [#allocation6], 1
    %931 = vsyncpa [#allocation9], 1
    %932 = vsyncpa [#allocation12], 1
    %933 = vsyncpa [#allocation4], 1
    %934 = vsyncpa [#allocation15], 1

</llo_original>
